<compile_context>
chip_gen: v6e
topology: v6e:2x2x1
jax: 0.10.0
libtpu: 0.0.40
codegen_flags: <defaults>
</compile_context>

<pallas_src>
import functools

import jax
import jax.numpy as jnp
from jax.experimental import pallas as pl
from jax.experimental.pallas import tpu as pltpu


def _round_up(a, b):
    return ((a + b - 1) // b) * b


def _choose_tn(n, c, *, f32_tile_budget_bytes=4 << 20, tn_cap=2048):
    """Pick the largest row tile that keeps a (tn, C) f32 working tile under
    the budget; multiple of 16 (works for both f32 and bf16 sublane packing)."""
    rows = max(16, f32_tile_budget_bytes // (4 * c))
    tn = min(tn_cap, rows, _round_up(n, 16))
    return max(16, (tn // 16) * 16)


def _label_smoothing_kernel(x_ref, t_ref, out_ref, *, confidence,
                            smooth_per_class, n_rows, tn):
    """One grid step processes a (tn, C) tile of logits.

    Computes log_softmax over the class (lane) axis, then a single fused
    weighted reduction:
        loss_row = -sum((confidence*onehot + smoothing/C) * logprobs, axis=-1)
    Padded rows (global row >= n_rows) are masked out.  The block's partial
    sum is written to its own output block (grid axis is "parallel").
    """
    i = pl.program_id(0)

    x = x_ref[...].astype(jnp.float32)                     # (tn, C)
    # numerically stable log-softmax along the class (lane) axis
    m = jnp.max(x, axis=-1, keepdims=True)
    shifted = x - m
    lse = jnp.log(jnp.sum(jnp.exp(shifted), axis=-1, keepdims=True))
    logprobs = shifted - lse                               # (tn, C)

    tgt = t_ref[...]                                       # (tn, 1) int32
    lane = jax.lax.broadcasted_iota(jnp.int32, logprobs.shape, 1)
    onehot = (lane == tgt).astype(jnp.float32)             # (tn, C)

    # Fused reduction: confidence*nll + smoothing*mean(-logprobs)
    weight = confidence * onehot + smooth_per_class        # (tn, C)
    row_loss = -jnp.sum(weight * logprobs, axis=-1, keepdims=True)  # (tn, 1)

    # Mask padded rows beyond the true batch size.
    row = i * tn + jax.lax.broadcasted_iota(jnp.int32, (tn, 1), 0)
    row_loss = jnp.where(row < n_rows, row_loss, 0.0)

    partial = jnp.sum(row_loss)                            # scalar
    # Lane/sublane-aligned (1, 8, 128) output block; wrapper reads [i, 0, 0].
    out_ref[...] = jnp.full((1, 8, 128), partial, dtype=jnp.float32)


def label_smoothing_loss(x, target, smoothing=0.0, *, tn=None,
                         vmem_limit_bytes=48 << 20):
    """Pallas equivalent of LabelSmoothingLoss.forward(x, target).

    x: (N, C) logits (f32 or bf16 — streamed in its own dtype).
    target: (N,) integer class indices.
    """
    n, c = x.shape
    confidence = 1.0 - smoothing
    smooth_per_class = smoothing / c

    if tn is None:
        tn = _choose_tn(n, c)
    else:
        tn = max(8, (tn // 8) * 8)

    # Pad the batch to a tile multiple; padded rows are masked in-kernel.
    n_pad = _round_up(n, tn)
    if n_pad != n:
        x = jnp.pad(x, ((0, n_pad - n), (0, 0)))
        target = jnp.pad(target, (0, n_pad - n))
    target2d = target.astype(jnp.int32).reshape(n_pad, 1)
    num_blocks = n_pad // tn

    kernel = functools.partial(
        _label_smoothing_kernel,
        confidence=confidence,
        smooth_per_class=smooth_per_class,
        n_rows=n,
        tn=tn,
    )

    partials = pl.pallas_call(
        kernel,
        out_shape=jax.ShapeDtypeStruct((num_blocks, 8, 128), jnp.float32),
        grid_spec=pltpu.PrefetchScalarGridSpec(
            num_scalar_prefetch=0,
            grid=(num_blocks,),
            in_specs=[
                pl.BlockSpec((tn, c), lambda i: (i, 0)),   # logits tile
                pl.BlockSpec((tn, 1), lambda i: (i, 0)),   # targets tile
            ],
            out_specs=pl.BlockSpec((1, 8, 128), lambda i: (i, 0, 0)),
        ),
        compiler_params=pltpu.CompilerParams(
            # Each block writes its own partial-sum block -> batch axis is
            # safe to shard across TensorCores (v7x megacore).
            dimension_semantics=("parallel",),
            vmem_limit_bytes=vmem_limit_bytes,
        ),
    )(x, target2d)

    return jnp.sum(partials[:, 0, 0]) / jnp.float32(n)


def _reference(x, target, smoothing):
    confidence = 1.0 - smoothing
    logprobs = jax.nn.log_softmax(x.astype(jnp.float32), axis=-1)
    nll = -jnp.take_along_axis(logprobs, target[:, None], axis=-1)[:, 0]
    smooth = -jnp.mean(logprobs, axis=-1)
    return jnp.mean(confidence * nll + smoothing * smooth)


if __name__ == "__main__":
    key = jax.random.PRNGKey(0)
    kx, kt, kx2, kt2 = jax.random.split(key, 4)

    # Case 1: small batch, single tile (auto tile size).
    N, C = 16, 32
    smoothing = 0.1
    x = jax.random.normal(kx, (N, C), dtype=jnp.float32)
    target = jax.random.randint(kt, (N,), 0, C, dtype=jnp.int32)

    loss = jax.block_until_ready(
        label_smoothing_loss(x, target, smoothing=smoothing))
    ref = _reference(x, target, smoothing)
    assert jnp.allclose(loss, ref, atol=1e-5, rtol=1e-5), (loss, ref)

    # Case 2: ragged batch + multi-block grid (exercises padding/masking and
    # the per-block "parallel" partial-sum path).
    N2, C2 = 40, 160
    x2 = jax.random.normal(kx2, (N2, C2), dtype=jnp.float32)
    t2 = jax.random.randint(kt2, (N2,), 0, C2, dtype=jnp.int32)
    loss2 = jax.block_until_ready(
        label_smoothing_loss(x2, t2, smoothing=0.2, tn=16))
    ref2 = _reference(x2, t2, 0.2)
    assert jnp.allclose(loss2, ref2, atol=1e-5, rtol=1e-5), (loss2, ref2)

    print("KERNEL_OK")
</pallas_src>

<mosaic_0001>
module attributes {stable_mosaic.version = 11 : i64} {
  func.func @_label_smoothing_kernel(%arg0: i32, %arg1: memref<16x32xf32, #tpu.memory_space<vmem>>, %arg2: memref<16x1xi32, #tpu.memory_space<vmem>>, %arg3: memref<1x8x128xf32, #tpu.memory_space<vmem>>) attributes {dimension_semantics = [#tpu.dimension_semantics<parallel>], iteration_bounds = array<i64: 1>, scalar_prefetch = 0 : i64, scratch_operands = 0 : i64, tpu.core_type = #tpu.core_type<tc>, window_params = [{transform_indices = @transform_0, window_bounds = array<i64: 16, 32>}, {transform_indices = @transform_1, window_bounds = array<i64: 16, 1>}, {transform_indices = @transform_2, window_bounds = array<i64: 1, 8, 128>}]} {
    %c0 = arith.constant 0 : index
    %c0_0 = arith.constant 0 : index
    %0 = vector.load %arg1[%c0, %c0_0] : memref<16x32xf32, #tpu.memory_space<vmem>>, vector<16x32xf32>
    %cst = arith.constant dense<0xFF800000> : vector<16xf32>
    %1 = vector.multi_reduction <maximumf>, %0, %cst [1] : vector<16x32xf32> to vector<16xf32>
    %2 = vector.shape_cast %1 : vector<16xf32> to vector<16x1xf32>
    %3 = vector.broadcast %2 : vector<16x1xf32> to vector<16x32xf32>
    %4 = arith.subf %0, %3 : vector<16x32xf32>
    %5 = math.exp %4 : vector<16x32xf32>
    %cst_1 = arith.constant dense<0.000000e+00> : vector<16xf32>
    %6 = vector.multi_reduction <add>, %5, %cst_1 [1] : vector<16x32xf32> to vector<16xf32>
    %7 = vector.shape_cast %6 : vector<16xf32> to vector<16x1xf32>
    %8 = math.log %7 : vector<16x1xf32>
    %9 = vector.broadcast %8 : vector<16x1xf32> to vector<16x32xf32>
    %10 = arith.subf %4, %9 : vector<16x32xf32>
    %c0_2 = arith.constant 0 : index
    %c0_3 = arith.constant 0 : index
    %11 = vector.load %arg2[%c0_2, %c0_3] : memref<16x1xi32, #tpu.memory_space<vmem>>, vector<16x1xi32>
    %12 = tpu.iota {dimensions = array<i32: 1>} : vector<16x32xi32>
    %13 = vector.broadcast %11 : vector<16x1xi32> to vector<16x32xi32>
    %14 = arith.cmpi eq, %12, %13 : vector<16x32xi32>
    %15 = arith.extui %14 : vector<16x32xi1> to vector<16x32xi32>
    %16 = arith.sitofp %15 : vector<16x32xi32> to vector<16x32xf32>
    %cst_4 = arith.constant 0.899999976 : f32
    %17 = vector.broadcast %cst_4 : f32 to vector<16x32xf32>
    %18 = arith.mulf %17, %16 : vector<16x32xf32>
    %cst_5 = arith.constant 3.125000e-03 : f32
    %19 = vector.broadcast %cst_5 : f32 to vector<16x32xf32>
    %20 = arith.addf %18, %19 : vector<16x32xf32>
    %21 = arith.mulf %20, %10 : vector<16x32xf32>
    %cst_6 = arith.constant dense<0.000000e+00> : vector<16xf32>
    %22 = vector.multi_reduction <add>, %21, %cst_6 [1] : vector<16x32xf32> to vector<16xf32>
    %23 = vector.shape_cast %22 : vector<16xf32> to vector<16x1xf32>
    %cst_7 = arith.constant 0.000000e+00 : f32
    %24 = vector.broadcast %cst_7 : f32 to vector<16x1xf32>
    %25 = arith.subf %24, %23 : vector<16x1xf32>
    %c16_i32 = arith.constant 16 : i32
    %26 = arith.muli %arg0, %c16_i32 : i32
    %27 = tpu.iota {dimensions = array<i32: 0>} : vector<16x1xi32>
    %28 = vector.broadcast %26 : i32 to vector<16x1xi32>
    %29 = arith.addi %28, %27 : vector<16x1xi32>
    %c16_i32_8 = arith.constant 16 : i32
    %30 = vector.broadcast %c16_i32_8 : i32 to vector<16x1xi32>
    %31 = arith.cmpi slt, %29, %30 : vector<16x1xi32>
    %cst_9 = arith.constant 0.000000e+00 : f32
    %32 = vector.broadcast %cst_9 : f32 to vector<16x1xf32>
    %33 = arith.select %31, %25, %32 : vector<16x1xi1>, vector<16x1xf32>
    %34 = vector.shape_cast %33 : vector<16x1xf32> to vector<1x16x1xf32>
    %cst_10 = arith.constant dense<0.000000e+00> : vector<1xf32>
    %35 = vector.multi_reduction <add>, %34, %cst_10 [1, 2] : vector<1x16x1xf32> to vector<1xf32>
    %36 = vector.shape_cast %35 : vector<1xf32> to vector<1x1x1xf32>
    %37 = vector.extract %36[0, 0, 0] : f32 from vector<1x1x1xf32>
    %38 = vector.broadcast %37 : f32 to vector<1x8x128xf32>
    %c0_11 = arith.constant 0 : index
    %c0_12 = arith.constant 0 : index
    %c0_13 = arith.constant 0 : index
    %39 = vector.load %arg3[%c0_11, %c0_12, %c0_13] : memref<1x8x128xf32, #tpu.memory_space<vmem>>, vector<1x8x128xf32>
    tpu.vector_store %arg3[%c0_11, %c0_12, %c0_13], %38 {strides = array<i32>} : memref<1x8x128xf32, #tpu.memory_space<vmem>>, vector<1x8x128xf32>,
    return
  }
  func.func @transform_0(%arg0: i32) -> (i32, i32) {
    %c0_i32 = arith.constant 0 : i32
    %c0_i32_0 = arith.constant 0 : i32
    return %arg0, %c0_i32 : i32, i32
  }
  func.func @transform_1(%arg0: i32) -> (i32, i32) {
    %c0_i32 = arith.constant 0 : i32
    %c0_i32_0 = arith.constant 0 : i32
    return %arg0, %c0_i32 : i32, i32
  }
  func.func @transform_2(%arg0: i32) -> (i32, i32, i32) {
    %c0_i32 = arith.constant 0 : i32
    %c0_i32_0 = arith.constant 0 : i32
    %c0_i32_1 = arith.constant 0 : i32
    return %arg0, %c0_i32, %c0_i32_0 : i32, i32, i32
  }
}

</mosaic_0001>

<llo_original>
// kernel: tpu_custom_call.1
$region0: #{tpu_custom_call.1}
  #allocation0 [shape = 'u32[]', space=smem, size = 0x4, offset = 0x4, fixed_abs, tag = 'smem constant byte address 0x4 - core index']
  #allocation1 [shape = 'u32[144,128]{1,0:T(1,128)}', space=vmem, size = 0x12000, scoped, tag = 'internal scratch']
  %s0 = inlined_call_operand.vmem [shape: f32[16,32], index: 0, kind: input, shape index: {}]
  %s1 = inlined_call_operand.vmem [shape: s32[16,1], index: 1, kind: input, shape index: {}]
  %s2 = inlined_call_operand.hbm [shape: f32[1,8,128], index: 2, kind: output, shape index: {}]
  %s3 = sld [smem:[#allocation0]]
  $region18: #{tpu_custom_call.1} parent=0
    _
  %s5 = ssub.s32 1, %s3
  %s6 = scalar_select 0, %s5, %s3
  $region1: #{tpu_custom_call.1} parent=0
    #allocation2 [shape = 'u8[4096]{0}', space=vmem, size = 0x1000, scoped, tag = 'output window, operand 0, single buffered']
    #allocation3 [shape = 's32[1]{0}', space=sflag, size = 0x4, scoped, tag = 'scoped memory for tpu_custom_call.1']
    %7 = vsyncpa [#allocation3], 0
    // Predicated region
    $region2: #{tpu_custom_call.1} parent=1 // pred_check
      _
    $region3: #{tpu_custom_call.1} parent=1 // pred_check_branch
      %9 = sbr.rel (0) target = $region5
    $region4: #{tpu_custom_call.1} parent=1 // pred_region
      _
    $region5: #{tpu_custom_call.1} parent=1 // pred_fallthru
      _
    // Predicated region
    $region6: #{tpu_custom_call.1} parent=1 // pred_check
      _
    $region7: #{tpu_custom_call.1} parent=1 // pred_check_branch
      %11 = sbr.rel (0) target = $region9
    $region8: #{tpu_custom_call.1} parent=1 // pred_region
      _
    $region9: #{tpu_custom_call.1} parent=1 // pred_fallthru
      _
    %v12 = vld [vmem:[%s0] sm:$0xff]
    %v13 = vld [vmem:[%s0 + $0x8] sm:$0xff]
    %vm14 = vcmask 261120
    %v15 = vsel %vm14, %v12, -inf
    %16 = vmax.xlane.f32.xlu0 %v15
    %v17 = vpop.xlane.xlu0 %16
    %v18 = vsel %vm14, %v13, -inf
    %19 = vmax.xlane.f32.xlu0 %v18
    %v20 = vpop.xlane.xlu0 %19
    %v21 = vsub.f32 %v12, %v17
    %v22 = vsub.f32 %v13, %v20
    %v23 = vmul.f32 %v21, 1.442695
    %v24 = vpow.pop %v23
    %v25 = vmul.f32 %v22, 1.442695
    %v26 = vpow.pop %v25
    %v27 = vsel %vm14, %v24, 0.0
    %28 = vadd.xlane.f32.xlu0 %v27
    %v29 = vpop.xlane.xlu0 %28
    %v30 = vsel %vm14, %v26, 0.0
    %31 = vadd.xlane.f32.xlu0 %v30
    %v32 = vpop.xlane.xlu0 %31
    %v33 = vlog2.pop %v29
    %v34 = vmul.f32 %v33, 0.6931472
    %v35 = vlog2.pop %v32
    %v36 = vmul.f32 %v35, 0.6931472
    %v37 = vsub.f32 %v21, %v34
    %v38 = vsub.f32 %v22, %v36
    %v39 = vld [vmem:[%s1] sm:$0xff]
    %v40 = vld [vmem:[%s1 + $0x8] sm:$0xff]
    %v41 = vlaneseq
    %v42 = vand.u32 %v41, 127
    %43 = vset.pattern.permute.xlu0 0
    %44 = vperm.xlu0 %43, %v39
    %v45 = vpop.permute.xlu0 %44
    %46 = vset.pattern.permute.xlu0 0
    %47 = vperm.xlu0 %46, %v40
    %v48 = vpop.permute.xlu0 %47
    %vm49 = vcmp.eq.s32.totalorder %v42, %v45
    %vm50 = vcmp.eq.s32.totalorder %v42, %v48
    %v51 = vsel %vm49, 1, 0
    %v52 = vsel %vm50, 1, 0
    %v53 = vcvt.s32.f32 %v51
    %v54 = vcvt.s32.f32 %v52
    %v55 = vmul.f32 %v53, 0.9
    %v56 = vmul.f32 %v54, 0.9
    %v57 = vadd.f32 %v55, 0.003125
    %v58 = vadd.f32 %v56, 0.003125
    %v59 = vmul.f32 %v57, %v37
    %v60 = vmul.f32 %v58, %v38
    %v61 = vsel %vm14, %v59, 0.0
    %62 = vadd.xlane.f32.xlu0 %v61
    %v63 = vpop.xlane.xlu0 %62
    %v64 = vsel %vm14, %v60, 0.0
    %65 = vadd.xlane.f32.xlu0 %v64
    %v66 = vpop.xlane.xlu0 %65
    %v67 = vsub.f32 0.0, %v63
    %v68 = vsub.f32 0.0, %v66
    %s69 = smul.u32 0, 16
    %v70 = vlaneseq
    %v71 = vshrl.u32 %v70, 7
    %v72 = vadd.s32 %v71, 8
    %v73 = vstv %s69
    %v74 = vadd.s32 %v73, %v71
    %v75 = vadd.s32 %v73, %v72
    %vm76 = vcmp.lt.s32.totalorder %v74, 16
    %vm77 = vcmp.lt.s32.totalorder %v75, 16
    %v78 = vsel %vm76, %v67, 0.0
    %v79 = vsel %vm77, %v68, 0.0
    %vm80 = vcmask 7168
    %v81 = vsel %vm80, %v78, 0.0
    %v82 = vsel %vm80, %v79, 0.0
    %v83 = vadd.f32 %v81, %v82
    %84 = vadd.xlane.f32.xlu0 %v83
    %v85 = vpop.xlane.xlu0 %84
    %v86 = vrot.slane %v85, 4
    %v87 = vadd.f32 %v85, %v86
    %v88 = vrot.slane %v87, 2
    %v89 = vadd.f32 %v87, %v88
    %v90 = vrot.slane %v89, 1
    %v91 = vadd.f32 %v89, %v90
    %s92 = vtos %v91
    %v93 = vstv %s92
    %94 = vst [vmem:[#allocation2] sm:$0xff] %v93
    // Predicated region
    $region10: #{tpu_custom_call.1} parent=1 // pred_check
      _
    $region11: #{tpu_custom_call.1} parent=1 // pred_check_branch
      %96 = sbr.rel (0) target = $region13
    $region12: #{tpu_custom_call.1} parent=1 // pred_region
      %s98 = ssub.s32 128, 128
      %99 = vsyncadd [#allocation3], %s98
      %s101 = sshll.u32 [#allocation2], 4
      %s102 = int_to_ptr.vmem [resolvable:$true] %s101
      %104 = dma.vmem_to_hbm [thread:$0]  %s102, 128, %s2, [#allocation3]
    $region13: #{tpu_custom_call.1} parent=1 // pred_fallthru
      _
    // Predicated region
    $region14: #{tpu_custom_call.1} parent=1 // pred_check
      _
    $region15: #{tpu_custom_call.1} parent=1 // pred_check_branch
      %106 = sbr.rel (0) target = $region17
    $region16: #{tpu_custom_call.1} parent=1 // pred_region
      %107 = dma.done [#allocation3], 128
    $region17: #{tpu_custom_call.1} parent=1 // pred_fallthru
      _
    %108 = vsyncpa [#allocation3], 1

</llo_original>
